<compile_context>
chip_gen: v7x
topology: tpu7x:2x2x1
jax: 0.10.0
libtpu: 0.0.40
codegen_flags: <defaults>
</compile_context>

<pallas_src>
import functools

import jax
import jax.numpy as jnp
from jax.experimental import pallas as pl
from jax.experimental.pallas import tpu as pltpu


def _fm_kernel(sel_ref, x_ref, o_ref, *, reduce_sum, precision):
    """sel_ref: (F*D, D) stacked identity.  x_ref: (BB, F*D) lane-dense slab.
    o_ref: (BB, 1) if reduce_sum else (BB, D)."""
    xf = x_ref[...].astype(jnp.float32)        # (BB, F*D)  full-lane-width
    xsq = xf * xf                              # full-width VPU square
    sel = sel_ref[...]                         # (F*D, D), entries are 0/1

    # Field sums via the MXU: (x @ sel)[b, d] = sum_f x[b, f*D + d].
    sum_f = jnp.dot(xf, sel, preferred_element_type=jnp.float32,
                    precision=precision)       # (BB, D)
    sumsq_f = jnp.dot(xsq, sel, preferred_element_type=jnp.float32,
                      precision=precision)     # (BB, D)

    ix = sum_f * sum_f - sumsq_f               # (BB, D)
    if reduce_sum:
        o_ref[...] = (0.5 * jnp.sum(ix, axis=1, keepdims=True)).astype(o_ref.dtype)
    else:
        o_ref[...] = (0.5 * ix).astype(o_ref.dtype)


def _choose_batch_tile(batch, row_bytes, itemsize):
    """~6 MiB input blocks; dtype-native row multiple (8 f32 / 16 bf16 / 32
    int8); >=2 grid steps (pipelining + both TensorCores); best-effort even
    step count for the v7x megacore."""
    row_mult = max(8, 32 // max(int(itemsize), 1))
    target_bytes = 6 * 1024 * 1024
    bt_cap = max(row_mult,
                 (target_bytes // max(row_bytes, 1)) // row_mult * row_mult)
    if batch <= row_mult:
        return int(row_mult)
    steps = max(2, pl.cdiv(batch, bt_cap))
    if steps % 2:
        steps += 1                             # prefer an even number of blocks
    bt = pl.cdiv(pl.cdiv(batch, steps), row_mult) * row_mult
    return int(max(row_mult, bt))


def factorization_machine(x, *, reduce_sum=True, batch_tile=None,
                          out_dtype=jnp.float32, precision=None):
    """Second-order FM interaction.  x: (B, F, D), f32 or bf16.

    Returns (B, 1) if reduce_sum else (B, D), dtype `out_dtype`.
    `precision` is forwarded to the in-kernel MXU dots (e.g.
    jax.lax.Precision.HIGHEST for strict-f32 field sums)."""
    B, F, D = x.shape
    itemsize = jnp.dtype(x.dtype).itemsize
    row_bytes = F * D * itemsize
    if batch_tile is None:
        batch_tile = _choose_batch_tile(B, row_bytes, itemsize)
    assert batch_tile % 8 == 0, "batch_tile must be a multiple of 8"

    # Lane-dense 2D view; free on row-major HBM, avoids F-sublane padding.
    x2d = x.reshape(B, F * D)

    # Stacked-identity selector: (x2d @ sel)[b, d] = sum_f x[b, f, d].
    sel = jnp.tile(jnp.eye(D, dtype=jnp.float32), (F, 1))   # (F*D, D)

    grid = (pl.cdiv(B, batch_tile),)          # ragged tail -> partial last block
    out_cols = 1 if reduce_sum else D
    out_shape = jax.ShapeDtypeStruct((B, out_cols), out_dtype)
    out_itemsize = jnp.dtype(out_dtype).itemsize

    kernel = functools.partial(_fm_kernel, reduce_sum=reduce_sum,
                               precision=precision)

    cost = pl.CostEstimate(
        flops=4 * B * (F * D) * D + 4 * B * F * D,
        transcendentals=0,
        bytes_accessed=(B * F * D * itemsize + F * D * D * 4
                        + B * out_cols * out_itemsize),
    )

    return pl.pallas_call(
        kernel,
        out_shape=out_shape,
        grid_spec=pltpu.PrefetchScalarGridSpec(
            num_scalar_prefetch=0,
            grid=grid,
            in_specs=[
                # Selector: same block every step -> DMA'd once, stays resident.
                pl.BlockSpec((F * D, D), lambda i: (0, 0)),
                # Input slab: (batch_tile, F*D) lane-dense blocks, pipelined.
                pl.BlockSpec((batch_tile, F * D), lambda i: (i, 0)),
            ],
            out_specs=pl.BlockSpec((batch_tile, out_cols), lambda i: (i, 0)),
        ),
        compiler_params=pltpu.CompilerParams(
            dimension_semantics=("parallel",),
            vmem_limit_bytes=48 * 1024 * 1024,
        ),
        cost_estimate=cost,
    )(sel, x2d)


def _reference(x, reduce_sum=True):
    x = x.astype(jnp.float32)
    square_of_sum = jnp.sum(x, axis=1) ** 2
    sum_of_square = jnp.sum(x ** 2, axis=1)
    ix = square_of_sum - sum_of_square
    if reduce_sum:
        ix = jnp.sum(ix, axis=1, keepdims=True)
    return 0.5 * ix


if __name__ == "__main__":
    key = jax.random.PRNGKey(0)
    B, F, D = 16, 4, 32  # batch, num_fields, embed_dim

    # bf16-representable values: the 0/1-selector matmul is then exact under
    # any MXU precision mode, so the checks below validate the kernel itself.
    x = jax.random.normal(key, (B, F, D), dtype=jnp.float32)
    x = x.astype(jnp.bfloat16).astype(jnp.float32)

    # reduce_sum=True, f32 (auto tile -> 8 rows, 2 grid steps)
    out = jax.block_until_ready(factorization_machine(x, reduce_sum=True))
    ref = _reference(x, reduce_sum=True)
    assert out.shape == (B, 1)
    assert jnp.allclose(out, ref, atol=1e-4, rtol=1e-4)

    # reduce_sum=False, f32
    out_nr = jax.block_until_ready(factorization_machine(x, reduce_sum=False))
    ref_nr = _reference(x, reduce_sum=False)
    assert out_nr.shape == (B, D)
    assert jnp.allclose(out_nr, ref_nr, atol=1e-4, rtol=1e-4)

    # bf16 input end-to-end (halves HBM bytes); tile rounds to 16 rows.
    xb = x.astype(jnp.bfloat16)
    out_b = jax.block_until_ready(factorization_machine(xb, reduce_sum=True))
    assert jnp.allclose(out_b, ref, atol=1e-4, rtol=1e-4)

    # Ragged batch: B=12 with tile 8 -> partial last block, no jnp.pad / slice.
    x12 = x[:12]
    out12 = jax.block_until_ready(factorization_machine(x12, reduce_sum=True))
    assert out12.shape == (12, 1)
    assert jnp.allclose(out12, ref[:12], atol=1e-4, rtol=1e-4)

    # Optional bf16 output for the non-reduced interaction.
    out_bf = jax.block_until_ready(
        factorization_machine(x, reduce_sum=False, out_dtype=jnp.bfloat16))
    assert out_bf.dtype == jnp.bfloat16
    assert jnp.allclose(out_bf.astype(jnp.float32), ref_nr, atol=5e-2, rtol=5e-2)

    print("KERNEL_OK")
</pallas_src>

<mosaic_0001>
module attributes {stable_mosaic.version = 11 : i64} {
  func.func @_fm_kernel(%arg0: i32, %arg1: memref<128x32xf32, #tpu.memory_space<vmem>>, %arg2: memref<8x128xf32, #tpu.memory_space<vmem>>, %arg3: memref<8x1xf32, #tpu.memory_space<vmem>>) attributes {dimension_semantics = [#tpu.dimension_semantics<parallel>], iteration_bounds = array<i64: 2>, scalar_prefetch = 0 : i64, scratch_operands = 0 : i64, tpu.core_type = #tpu.core_type<tc>, window_params = [{pipeline_mode = #tpu.pipeline_mode<synchronous>, transform_indices = @transform_0, window_bounds = array<i64: 128, 32>}, {transform_indices = @transform_1, window_bounds = array<i64: 8, 128>}, {transform_indices = @transform_2, window_bounds = array<i64: 8, 1>}]} {
    %c0 = arith.constant 0 : index
    %c0_0 = arith.constant 0 : index
    %0 = vector.load %arg2[%c0, %c0_0] : memref<8x128xf32, #tpu.memory_space<vmem>>, vector<8x128xf32>
    %1 = arith.mulf %0, %0 : vector<8x128xf32>
    %c0_1 = arith.constant 0 : index
    %c0_2 = arith.constant 0 : index
    %2 = vector.load %arg1[%c0_1, %c0_2] : memref<128x32xf32, #tpu.memory_space<vmem>>, vector<128x32xf32>
    %cst = arith.constant dense<0.000000e+00> : vector<8x32xf32>
    %3 = tpu.matmul %0, %2, %cst {dimension_numbers = #tpu.dot_dimension_numbers<[1], [0], [0], [1], [0, 0, 1, 1], [], []>} : vector<8x128xf32>, vector<128x32xf32>, vector<8x32xf32> -> vector<8x32xf32>
    %cst_3 = arith.constant dense<0.000000e+00> : vector<8x32xf32>
    %4 = tpu.matmul %1, %2, %cst_3 {dimension_numbers = #tpu.dot_dimension_numbers<[1], [0], [0], [1], [0, 0, 1, 1], [], []>} : vector<8x128xf32>, vector<128x32xf32>, vector<8x32xf32> -> vector<8x32xf32>
    %5 = arith.mulf %3, %3 : vector<8x32xf32>
    %6 = arith.subf %5, %4 : vector<8x32xf32>
    %cst_4 = arith.constant dense<0.000000e+00> : vector<8xf32>
    %7 = vector.multi_reduction <add>, %6, %cst_4 [1] : vector<8x32xf32> to vector<8xf32>
    %8 = vector.shape_cast %7 : vector<8xf32> to vector<8x1xf32>
    %cst_5 = arith.constant 5.000000e-01 : f32
    %9 = vector.broadcast %cst_5 : f32 to vector<8x1xf32>
    %10 = arith.mulf %9, %8 : vector<8x1xf32>
    %c0_6 = arith.constant 0 : index
    %c0_7 = arith.constant 0 : index
    %11 = vector.load %arg3[%c0_6, %c0_7] : memref<8x1xf32, #tpu.memory_space<vmem>>, vector<8x1xf32>
    tpu.vector_store %arg3[%c0_6, %c0_7], %10 {strides = array<i32>} : memref<8x1xf32, #tpu.memory_space<vmem>>, vector<8x1xf32>,
    return
  }
  func.func @transform_0(%arg0: i32) -> (i32, i32) {
    %c0_i32 = arith.constant 0 : i32
    %c0_i32_0 = arith.constant 0 : i32
    %c0_i32_1 = arith.constant 0 : i32
    return %c0_i32, %c0_i32_0 : i32, i32
  }
  func.func @transform_1(%arg0: i32) -> (i32, i32) {
    %c0_i32 = arith.constant 0 : i32
    %c0_i32_0 = arith.constant 0 : i32
    return %arg0, %c0_i32 : i32, i32
  }
  func.func @transform_2(%arg0: i32) -> (i32, i32) {
    %c0_i32 = arith.constant 0 : i32
    %c0_i32_0 = arith.constant 0 : i32
    return %arg0, %c0_i32 : i32, i32
  }
}

</mosaic_0001>

<llo_original>
// kernel: tpu_custom_call.1
$region0: #{tpu_custom_call.1}
  #allocation0 [shape = 'u32[]', space=smem, size = 0x4, offset = 0x4, fixed_abs, tag = 'smem constant byte address 0x4 - core index']
  #allocation1 [shape = 'u32[144,128]{1,0:T(1,128)}', space=vmem, size = 0x12000, scoped, tag = 'internal scratch']
  %s0 = inlined_call_operand.vmem [shape: f32[128,32], index: 0, kind: input, shape index: {}]
  %s1 = inlined_call_operand.vmem [shape: f32[16,128], index: 1, kind: input, shape index: {}]
  %s2 = inlined_call_operand.vmem [shape: f32[16,1], index: 2, kind: output, shape index: {}]
  %s3 = sld [smem:[#allocation0]]
  $region41: #{tpu_custom_call.1} parent=0
    _
  %s5 = ssub.s32 1, %s3
  %s6 = scalar_select 0, %s5, %s3
  loop: start=0, step=1, limit=4
  $region2: #{tpu_custom_call.1} parent=0 // loop_pre_header
    _
  $region3: #{tpu_custom_call.1} parent=0 // loop_header
    %s8 = sphi 0, %s12
    %p9 = scmp.ge.s32.totalorder %s8, 4
    %s16 = sphi 0, %s16
    %s18 = sphi 0, %s16
    %s19 = sphi 0, %s18
    %s33 = sphi 0, %s19
    %s39 = sphi 0, %s41
    %s42 = sphi 0, %s39
    %s43 = sphi 0, %s42
    %s59 = sphi 0, %s43
    %s65 = sphi 0, %s67
    %s68 = sphi 0, %s65
    %s69 = sphi 0, %s68
    %s85 = sphi 0, %s69
  $region4: #{tpu_custom_call.1} parent=0 // loop_header_branch
    %11 = sbr.rel (%p9) target = $region8
  $region5: #{tpu_custom_call.1} parent=0 // loop_body
    %s13 = ssub.s32 %s8, 1
    %s14 = ssub.s32 %s8, 2
    %s15 = sadd.s32 %s8, 1
    %s17 = sadd.s32 %s16, 1
    %p20 = scmp.eq.s32.totalorder %s8, 1
    %p21 = scmp.ne.s32.totalorder %s16, %s18
    %p22 = scmp.eq.s32.totalorder %s8, 0
    %p23 = por %p21, %p22
    %p24 = scmp.ne.s32.totalorder %s16, %s18
    %p25 = scmp.eq.s32.totalorder %s13, 1
    %p26 = por %p24, %p25
    %p27 = scmp.ne.s32.totalorder %s18, %s19
    %p28 = scmp.eq.s32.totalorder %s13, 0
    %p29 = por %p27, %p28
    %p30 = scmp.ne.s32.totalorder %s18, %s19
    %p31 = scmp.eq.s32.totalorder %s14, 1
    %p32 = por %p30, %p31
    %p34 = scmp.ne.s32.totalorder %s19, %s33
    %p35 = scmp.eq.s32.totalorder %s14, 0
    %p36 = por %p34, %p35
    %s37 = ssub.s32 %s8, %s15
    %p38 = scmp.eq.s32.totalorder %s37, 0
    %s40 = sadd.s32 %s39, 1
    %s41 = scalar_select %p38, %s39, %s40
    %p44 = pneg %p38
    %p45 = scmp.eq.s32.totalorder %s8, 1
    %p46 = por %p44, %p45
    %p47 = scmp.ne.s32.totalorder %s39, %s42
    %p48 = scmp.eq.s32.totalorder %s8, 0
    %p49 = por %p47, %p48
    %p50 = scmp.ne.s32.totalorder %s39, %s42
    %p51 = scmp.eq.s32.totalorder %s13, 1
    %p52 = por %p50, %p51
    %p53 = scmp.ne.s32.totalorder %s42, %s43
    %p54 = scmp.eq.s32.totalorder %s13, 0
    %p55 = por %p53, %p54
    %p56 = scmp.ne.s32.totalorder %s42, %s43
    %p57 = scmp.eq.s32.totalorder %s14, 1
    %p58 = por %p56, %p57
    %p60 = scmp.ne.s32.totalorder %s43, %s59
    %p61 = scmp.eq.s32.totalorder %s14, 0
    %p62 = por %p60, %p61
    %s63 = ssub.s32 %s8, %s15
    %p64 = scmp.eq.s32.totalorder %s63, 0
    %s66 = sadd.s32 %s65, 1
    %s67 = scalar_select %p64, %s65, %s66
    %p70 = pneg %p64
    %p71 = scmp.eq.s32.totalorder %s8, 1
    %p72 = por %p70, %p71
    %p73 = scmp.ne.s32.totalorder %s65, %s68
    %p74 = scmp.eq.s32.totalorder %s8, 0
    %p75 = por %p73, %p74
    %p76 = scmp.ne.s32.totalorder %s65, %s68
    %p77 = scmp.eq.s32.totalorder %s13, 1
    %p78 = por %p76, %p77
    %p79 = scmp.ne.s32.totalorder %s68, %s69
    %p80 = scmp.eq.s32.totalorder %s13, 0
    %p81 = por %p79, %p80
    %p82 = scmp.ne.s32.totalorder %s68, %s69
    %p83 = scmp.eq.s32.totalorder %s14, 1
    %p84 = por %p82, %p83
    %p86 = scmp.ne.s32.totalorder %s69, %s85
    %p87 = scmp.eq.s32.totalorder %s14, 0
    %p88 = por %p86, %p87
    %p89 = scmp.le.s32.totalorder 1, %s8
    %p90 = scmp.lt.s32.totalorder %s8, 3
    %p91 = pnand %p89, %p90
    %p92 = pneg %p91
    // Predicated region
    $region9: #{tpu_custom_call.1} parent=5 // pred_check
      _
    $region10: #{tpu_custom_call.1} parent=5 // pred_check_branch
      %94 = sbr.rel (%p91) target = $region12
    $region11: #{tpu_custom_call.1} parent=5 // pred_region
      %s95 = ssub.s32 %s8, 1
      // Predicated region
      $region13: #{tpu_custom_call.1} parent=11 // pred_check
        %p96 = pneg %p29
      $region14: #{tpu_custom_call.1} parent=11 // pred_check_branch
        %98 = sbr.rel (%p96) target = $region16
      $region15: #{tpu_custom_call.1} parent=11 // pred_region
        _
      $region16: #{tpu_custom_call.1} parent=11 // pred_fallthru
        _
    $region12: #{tpu_custom_call.1} parent=5 // pred_fallthru
      _
    %p99 = scmp.lt.s32.totalorder %s8, 2
    // Predicated region
    $region17: #{tpu_custom_call.1} parent=5 // pred_check
      %p100 = pneg %p99
    $region18: #{tpu_custom_call.1} parent=5 // pred_check_branch
      %102 = sbr.rel (%p100) target = $region20
    $region19: #{tpu_custom_call.1} parent=5 // pred_region
      // Predicated region
      $region21: #{tpu_custom_call.1} parent=19 // pred_check
        %p103 = pneg %p49
      $region22: #{tpu_custom_call.1} parent=19 // pred_check_branch
        %105 = sbr.rel (%p103) target = $region24
      $region23: #{tpu_custom_call.1} parent=19 // pred_region
        %p106 = scmp.lt.s32.totalorder %s8, 1
        %s107 = scalar_select %p106, %s8, 1
        %s108 = smul.addr %s107, 8
        %s109 = scalar_lea.vmem %s1, %s108
      $region24: #{tpu_custom_call.1} parent=19 // pred_fallthru
        _
    $region20: #{tpu_custom_call.1} parent=5 // pred_fallthru
      _
    %p110 = scmp.le.s32.totalorder 1, %s8
    %p111 = scmp.lt.s32.totalorder %s8, 3
    %p112 = pnand %p110, %p111
    %p113 = pneg %p112
    // Predicated region
    $region25: #{tpu_custom_call.1} parent=5 // pred_check
      _
    $region26: #{tpu_custom_call.1} parent=5 // pred_check_branch
      %115 = sbr.rel (%p112) target = $region28
    $region27: #{tpu_custom_call.1} parent=5 // pred_region
      %s116 = ssub.s32 %s8, 1
      %p117 = pneg %p29
      %p118 = pneg %p26
      %p119 = scmp.lt.s32.totalorder %s13, 1
      %s120 = scalar_select %p119, %s13, 1
      %s121 = smul.addr %s120, 8
      %s122 = scalar_lea.vmem %s1, %s121
      %p123 = pneg %p55
      %p124 = pneg %p52
      %p125 = pneg %p81
      %p126 = pneg %p78
      %p127 = scmp.lt.s32.totalorder %s13, 1
      %s128 = scalar_select %p127, %s13, 1
      %s129 = smul.addr %s128, 8
      %s130 = scalar_lea.vmem %s2, %s129
      %p131 = scmp.lt.s32.totalorder %s13, 1
      %s132 = scalar_select %p131, %s13, 1
      %s133 = smul.addr %s132, 8
      %s134 = scalar_lea.vmem %s1, %s133
      %p135 = scmp.lt.s32.totalorder %s13, 1
      %s136 = scalar_select %p135, %s13, 1
      %s137 = smul.addr %s136, 8
      %s138 = scalar_lea.vmem %s2, %s137
      %v139 = vld [vmem:[%s134] sm:$0xff]
      %v140 = vmul.f32 %v139, %v139
      %v141 = vld [vmem:[%s0] sm:$0xff]
      %v142 = vld [vmem:[%s0 + $0x8] sm:$0xff]
      %v143 = vld [vmem:[%s0 + $0x10] sm:$0xff]
      %v144 = vld [vmem:[%s0 + $0x18] sm:$0xff]
      %v145 = vld [vmem:[%s0 + $0x20] sm:$0xff]
      %v146 = vld [vmem:[%s0 + $0x28] sm:$0xff]
      %v147 = vld [vmem:[%s0 + $0x30] sm:$0xff]
      %v148 = vld [vmem:[%s0 + $0x38] sm:$0xff]
      %v149 = vld [vmem:[%s0 + $0x40] sm:$0xff]
      %v150 = vld [vmem:[%s0 + $0x48] sm:$0xff]
      %v151 = vld [vmem:[%s0 + $0x50] sm:$0xff]
      %v152 = vld [vmem:[%s0 + $0x58] sm:$0xff]
      %v153 = vld [vmem:[%s0 + $0x60] sm:$0xff]
      %v154 = vld [vmem:[%s0 + $0x68] sm:$0xff]
      %v155 = vld [vmem:[%s0 + $0x70] sm:$0xff]
      %v156 = vld [vmem:[%s0 + $0x78] sm:$0xff]
      %157 = vmatprep.subr.mxu0 0.0
      %158 = vmatpush1.msra.mxu0 %v141
      %159 = vmatprep.subr.mxu0 0.0
      %160 = vmatpush1.msra.mxu0 %v142
      %161 = vmatprep.subr.mxu0 0.0
      %162 = vmatpush1.msra.mxu0 %v143
      %163 = vmatprep.subr.mxu0 0.0
      %164 = vmatpush1.msra.mxu0 %v144
      %165 = vmatprep.subr.mxu0 0.0
      %166 = vmatpush1.msra.mxu0 %v145
      %167 = vmatprep.subr.mxu0 0.0
      %168 = vmatpush1.msra.mxu0 %v146
      %169 = vmatprep.subr.mxu0 0.0
      %170 = vmatpush1.msra.mxu0 %v147
      %171 = vmatprep.subr.mxu0 0.0
      %172 = vmatpush1.msra.mxu0 %v148
      %173 = vmatprep.subr.mxu0 0.0
      %174 = vmatpush1.msra.mxu0 %v149
      %175 = vmatprep.subr.mxu0 0.0
      %176 = vmatpush1.msra.mxu0 %v150
      %177 = vmatprep.subr.mxu0 0.0
      %178 = vmatpush1.msra.mxu0 %v151
      %179 = vmatprep.subr.mxu0 0.0
      %180 = vmatpush1.msra.mxu0 %v152
      %181 = vmatprep.subr.mxu0 0.0
      %182 = vmatpush1.msra.mxu0 %v153
      %183 = vmatprep.subr.mxu0 0.0
      %184 = vmatpush1.msra.mxu0 %v154
      %185 = vmatprep.subr.mxu0 0.0
      %186 = vmatpush1.msra.mxu0 %v155
      %187 = vmatprep.subr.mxu0 0.0
      %188 = vmatpush1.msra.mxu0 %v156
      %189 = vmatprep.subr.mxu0 0.0
      %190 = vmatpush1.msra.mxu0 0.0
      %191 = vmatprep.subr.mxu0 0.0
      %192 = vmatpush1.msra.mxu0 0.0
      %193 = vmatprep.subr.mxu0 0.0
      %194 = vmatpush1.msra.mxu0 0.0
      %195 = vmatprep.subr.mxu0 0.0
      %196 = vmatpush1.msra.mxu0 0.0
      %197 = vmatprep.subr.mxu0 0.0
      %198 = vmatpush1.msra.mxu0 0.0
      %199 = vmatprep.subr.mxu0 0.0
      %200 = vmatpush1.msra.mxu0 0.0
      %201 = vmatprep.subr.mxu0 0.0
      %202 = vmatpush1.msra.mxu0 0.0
      %203 = vmatprep.subr.mxu0 0.0
      %204 = vmatpush1.msra.mxu0 0.0
      %205 = vmatprep.subr.mxu0 0.0
      %206 = vmatpush1.msra.mxu0 0.0
      %207 = vmatprep.subr.mxu0 0.0
      %208 = vmatpush1.msra.mxu0 0.0
      %209 = vmatprep.subr.mxu0 0.0
      %210 = vmatpush1.msra.mxu0 0.0
      %211 = vmatprep.subr.mxu0 0.0
      %212 = vmatpush1.msra.mxu0 0.0
      %213 = vmatprep.subr.mxu0 0.0
      %214 = vmatpush1.msra.mxu0 0.0
      %215 = vmatprep.subr.mxu0 0.0
      %216 = vmatpush1.msra.mxu0 0.0
      %217 = vmatprep.subr.mxu0 0.0
      %218 = vmatpush1.msra.mxu0 0.0
      %219 = vmatprep.subr.mxu0 0.0
      %220 = vmatpush1.msra.mxu0 0.0
      %221 = vmatprep.mubr.f32.mxu0 0.0
      %222 = vmatmul.mubr.f32.gmra.mrb[0].mxu0 %v139
      %v223 = vpop.f32.mrb[0].mxu0
      %v224 = vadd.f32 0.0, %v223
      %v225 = vpop.f32.mrb[0].mxu0
      %226 = vdwg.mxu0
      %227 = vmatprep.subr.mxu0 0.0
      %228 = vmatpush1.msra.mxu0 %v141
      %229 = vmatprep.subr.mxu0 0.0
      %230 = vmatpush1.msra.mxu0 %v142
      %231 = vmatprep.subr.mxu0 0.0
      %232 = vmatpush1.msra.mxu0 %v143
      %233 = vmatprep.subr.mxu0 0.0
      %234 = vmatpush1.msra.mxu0 %v144
      %235 = vmatprep.subr.mxu0 0.0
      %236 = vmatpush1.msra.mxu0 %v145
      %237 = vmatprep.subr.mxu0 0.0
      %238 = vmatpush1.msra.mxu0 %v146
      %239 = vmatprep.subr.mxu0 0.0
      %240 = vmatpush1.msra.mxu0 %v147
      %241 = vmatprep.subr.mxu0 0.0
      %242 = vmatpush1.msra.mxu0 %v148
      %243 = vmatprep.subr.mxu0 0.0
      %244 = vmatpush1.msra.mxu0 %v149
      %245 = vmatprep.subr.mxu0 0.0
      %246 = vmatpush1.msra.mxu0 %v150
      %247 = vmatprep.subr.mxu0 0.0
      %248 = vmatpush1.msra.mxu0 %v151
      %249 = vmatprep.subr.mxu0 0.0
      %250 = vmatpush1.msra.mxu0 %v152
      %251 = vmatprep.subr.mxu0 0.0
      %252 = vmatpush1.msra.mxu0 %v153
      %253 = vmatprep.subr.mxu0 0.0
      %254 = vmatpush1.msra.mxu0 %v154
      %255 = vmatprep.subr.mxu0 0.0
      %256 = vmatpush1.msra.mxu0 %v155
      %257 = vmatprep.subr.mxu0 0.0
      %258 = vmatpush1.msra.mxu0 %v156
      %259 = vmatprep.subr.mxu0 0.0
      %260 = vmatpush1.msra.mxu0 0.0
      %261 = vmatprep.subr.mxu0 0.0
      %262 = vmatpush1.msra.mxu0 0.0
      %263 = vmatprep.subr.mxu0 0.0
      %264 = vmatpush1.msra.mxu0 0.0
      %265 = vmatprep.subr.mxu0 0.0
      %266 = vmatpush1.msra.mxu0 0.0
      %267 = vmatprep.subr.mxu0 0.0
      %268 = vmatpush1.msra.mxu0 0.0
      %269 = vmatprep.subr.mxu0 0.0
      %270 = vmatpush1.msra.mxu0 0.0
      %271 = vmatprep.subr.mxu0 0.0
      %272 = vmatpush1.msra.mxu0 0.0
      %273 = vmatprep.subr.mxu0 0.0
      %274 = vmatpush1.msra.mxu0 0.0
      %275 = vmatprep.subr.mxu0 0.0
      %276 = vmatpush1.msra.mxu0 0.0
      %277 = vmatprep.subr.mxu0 0.0
      %278 = vmatpush1.msra.mxu0 0.0
      %279 = vmatprep.subr.mxu0 0.0
      %280 = vmatpush1.msra.mxu0 0.0
      %281 = vmatprep.subr.mxu0 0.0
      %282 = vmatpush1.msra.mxu0 0.0
      %283 = vmatprep.subr.mxu0 0.0
      %284 = vmatpush1.msra.mxu0 0.0
      %285 = vmatprep.subr.mxu0 0.0
      %286 = vmatpush1.msra.mxu0 0.0
      %287 = vmatprep.subr.mxu0 0.0
      %288 = vmatpush1.msra.mxu0 0.0
      %289 = vmatprep.subr.mxu0 0.0
      %290 = vmatpush1.msra.mxu0 0.0
      %291 = vmatprep.mubr.f32.mxu0 0.0
      %292 = vmatmul.mubr.f32.gmra.mrb[0].mxu0 %v140
      %v293 = vpop.f32.mrb[0].mxu0
      %v294 = vadd.f32 0.0, %v293
      %v295 = vpop.f32.mrb[0].mxu0
      %296 = vdwg.mxu0
      %v297 = vmul.f32 %v224, %v224
      %v298 = vsub.f32 %v297, %v294
      %vm299 = vcmask 261120
      %v300 = vsel %vm299, %v298, 0.0
      %301 = vadd.xlane.f32.xlu0 %v300
      %v302 = vpop.xlane.xlu0 %301
      %v303 = vmul.f32 %v302, 0.5
      %vm304 = vcmask 7168
      %305 = vst.msk [vmem:[%s138] sm:$0xff] %vm304, %v303
      %p306 = scmp.lt.s32.totalorder %s13, 1
      %s307 = scalar_select %p306, %s13, 1
      %s308 = smul.addr %s307, 8
      %s309 = scalar_lea.vmem %s2, %s308
      // Predicated region
      $region29: #{tpu_custom_call.1} parent=27 // pred_check
        %p310 = pneg %p78
      $region30: #{tpu_custom_call.1} parent=27 // pred_check_branch
        %312 = sbr.rel (%p310) target = $region32
      $region31: #{tpu_custom_call.1} parent=27 // pred_region
        _
      $region32: #{tpu_custom_call.1} parent=27 // pred_fallthru
        _
    $region28: #{tpu_custom_call.1} parent=5 // pred_fallthru
      _
    %p313 = scmp.le.s32.totalorder 2, %s8
    // Predicated region
    $region33: #{tpu_custom_call.1} parent=5 // pred_check
      %p314 = pneg %p313
    $region34: #{tpu_custom_call.1} parent=5 // pred_check_branch
      %316 = sbr.rel (%p314) target = $region36
    $region35: #{tpu_custom_call.1} parent=5 // pred_region
      %s317 = ssub.s32 %s8, 2
      // Predicated region
      $region37: #{tpu_custom_call.1} parent=35 // pred_check
        %p318 = pneg %p84
      $region38: #{tpu_custom_call.1} parent=35 // pred_check_branch
        %320 = sbr.rel (%p318) target = $region40
      $region39: #{tpu_custom_call.1} parent=35 // pred_region
        %p321 = scmp.lt.s32.totalorder %s14, 1
        %s322 = scalar_select %p321, %s14, 1
        %s323 = smul.addr %s322, 8
        %s324 = scalar_lea.vmem %s2, %s323
      $region40: #{tpu_custom_call.1} parent=35 // pred_fallthru
        _
    $region36: #{tpu_custom_call.1} parent=5 // pred_fallthru
      _
  $region6: #{tpu_custom_call.1} parent=0 // loop_footer
    %s12 = sadd.s32 1, %s8
  $region7: #{tpu_custom_call.1} parent=0 // loop_footer_branch
    %7 = sbr.rel target = $region3
  $region8: #{tpu_custom_call.1} parent=0 // loop_exit
    _

</llo_original>
